<compile_context>
chip_gen: v5e
topology: v5e:2x2
jax: 0.10.0
libtpu: 0.0.40
codegen_flags: <defaults>
</compile_context>

<pallas_src>
import functools

import jax
import jax.numpy as jnp
from jax import lax
from jax.experimental import pallas as pl
from jax.experimental.pallas import tpu as pltpu

_EPS = 1e-12          # F.normalize default eps (applied to the norm)
_SUMSQ_GUARD = 1e-30  # guard on sum-of-squares; keeps rsqrt finite for
                      # degenerate / out-of-bounds pixel lanes


def _cluster_lookup_kernel(x_ref, clusters_ref, probs_ref, partial_ref, *,
                           alpha, hw, tile_hw, approx_recip):
    """One grid step processes a (C, tile_hw) slab of pixels of one batch image.

    x_ref:        (1, C, TP)    model dtype  raw features, channels on sublanes
    clusters_ref: (N, C)        bf16/f32     pre-normalized centroids (grid-resident)
    probs_ref:    (1, N, TP)    out dtype    softmax(inner*alpha) slab (lane-dense)
    partial_ref:  (1, 1, 1, TP) f32          per-lane partial sums of probs*inner
    """
    t = pl.program_id(1)

    # --- L2-normalize features along the channel (sublane) axis --------------
    x = x_ref[0].astype(jnp.float32)                          # (C, TP)
    sumsq = jnp.sum(x * x, axis=0, keepdims=True)              # (1, TP)
    inv_norm = lax.rsqrt(jnp.maximum(sumsq, _SUMSQ_GUARD))     # EUP rsqrt
    x_normed = x * inv_norm

    # --- inner products: (N, C) @ (C, TP) -> (N, TP)  ('bchw,nc->bnhw') ------
    c = clusters_ref[...]
    inner = jnp.dot(c, x_normed.astype(c.dtype),
                    preferred_element_type=jnp.float32)        # (N, TP) f32

    # --- softmax over clusters (sublane axis), f32 on-chip -------------------
    scaled = inner * jnp.float32(alpha)
    m = jnp.max(scaled, axis=0, keepdims=True)                 # (1, TP)
    e = jnp.exp(scaled - m)
    denom = jnp.sum(e, axis=0, keepdims=True)
    probs = e * pl.reciprocal(denom, approx=approx_recip)
    probs_ref[...] = probs.astype(probs_ref.dtype)[None]       # lane-dense store

    # --- per-tile partial loss: sum over clusters, mask out-of-range lanes ---
    lane = lax.broadcasted_iota(jnp.int32, (1, tile_hw), 1)
    valid = (t * tile_hw + lane) < hw
    contrib = jnp.sum(probs * inner, axis=0, keepdims=True)    # (1, TP)
    partial_ref[...] = jnp.where(valid, contrib, 0.0).reshape(1, 1, 1, tile_hw)


def cluster_lookup_forward(x, clusters, alpha, *, tile_hw=2048,
                           use_bf16_dot=True, probs_dtype=jnp.float32):
    """x: (B, C, H, W), clusters: (N, C), alpha: python float.

    Returns (cluster_loss: f32 scalar, cluster_probs: (B, N, H, W) probs_dtype).
    """
    B, C, H, W = x.shape
    N, Cc = clusters.shape
    assert C == Cc, "feature dim must match cluster dim"
    HW = H * W

    # Effective lane tile: multiple of 128, or the full HW extent if smaller.
    req = max(128, (int(tile_hw) // 128) * 128)
    if HW <= req:
        tile = HW                     # single block == full dim (always legal)
        num_tiles = 1
    else:
        tile = req                    # ragged trailing block handled by Pallas
        num_tiles = pl.cdiv(HW, tile)

    # Hoisted cluster prep: L2-normalize once in the wrapper (N x C is tiny).
    dot_dtype = jnp.bfloat16 if use_bf16_dot else jnp.float32
    c32 = clusters.astype(jnp.float32)
    c_normed = (c32 / jnp.maximum(jnp.linalg.norm(c32, axis=1, keepdims=True),
                                  _EPS)).astype(dot_dtype)

    # Free reshape of contiguous trailing dims: NCHW -> (B, C, H*W).
    x3 = x.reshape(B, C, HW)

    kernel = functools.partial(
        _cluster_lookup_kernel, alpha=float(alpha), hw=HW, tile_hw=tile,
        approx_recip=use_bf16_dot)

    # VMEM need: double-buffered x / probs / partial slabs + resident clusters,
    # plus ~8 MiB headroom; capped below v7x's 64 MiB physical VMEM per TC.
    need = (2 * C * tile * jnp.dtype(x.dtype).itemsize
            + 2 * N * tile * jnp.dtype(probs_dtype).itemsize
            + 2 * tile * 4
            + 2 * N * C * jnp.dtype(dot_dtype).itemsize)
    vmem_limit = int(min(need + (8 << 20), 56 << 20))

    probs3, partial = pl.pallas_call(
        kernel,
        out_shape=(
            jax.ShapeDtypeStruct((B, N, HW), probs_dtype),               # probs
            jax.ShapeDtypeStruct((B, num_tiles, 1, tile), jnp.float32),  # partial loss
        ),
        grid_spec=pltpu.PrefetchScalarGridSpec(
            num_scalar_prefetch=0,
            grid=(B, num_tiles),
            in_specs=[
                pl.BlockSpec((1, C, tile), lambda b, t: (b, 0, t)),   # x slab
                pl.BlockSpec((N, C), lambda b, t: (0, 0)),            # clusters (resident)
            ],
            out_specs=[
                pl.BlockSpec((1, N, tile), lambda b, t: (b, 0, t)),       # probs slab
                pl.BlockSpec((1, 1, 1, tile), lambda b, t: (b, t, 0, 0)), # partial loss
            ],
        ),
        compiler_params=pltpu.CompilerParams(
            dimension_semantics=("parallel", "parallel"),  # no cross-iter state
            vmem_limit_bytes=vmem_limit,
        ),
    )(x3, c_normed)

    # Final tiny reduction in plain JAX: -(probs*inner).sum(1).mean()
    loss = -jnp.sum(partial) / (B * HW)

    # Free reshape back to NCHW-like layout: (B, N, HW) -> (B, N, H, W).
    probs = probs3.reshape(B, N, H, W)
    return loss, probs


def _reference(x, clusters, alpha):
    """Pure-JAX reference of the PyTorch forward (alpha path)."""
    c = clusters / jnp.maximum(
        jnp.linalg.norm(clusters, axis=1, keepdims=True), _EPS)
    f = x / jnp.maximum(jnp.linalg.norm(x, axis=1, keepdims=True), _EPS)
    inner = jnp.einsum('bchw,nc->bnhw', f, c)
    probs = jax.nn.softmax(inner * alpha, axis=1)
    loss = -jnp.mean(jnp.sum(probs * inner, axis=1))
    return loss, probs


if __name__ == "__main__":
    B, C, H, W = 2, 4, 16, 16      # dim = C = 4
    n_classes = 8
    alpha = 3.0

    key = jax.random.PRNGKey(0)
    kx, kc = jax.random.split(key)
    x = jax.random.normal(kx, (B, C, H, W), dtype=jnp.float32)
    clusters = jax.random.normal(kc, (n_classes, C), dtype=jnp.float32)

    # 1) Default fast path (bf16 MXU operands + approx reciprocal), HW = 256.
    loss, probs = cluster_lookup_forward(x, clusters, alpha)
    jax.block_until_ready((loss, probs))
    ref_loss, ref_probs = _reference(x, clusters, alpha)
    assert probs.shape == (B, n_classes, H, W)
    assert bool(jnp.all(jnp.isfinite(probs)))
    assert jnp.allclose(loss, ref_loss, atol=5e-2, rtol=5e-2)
    assert jnp.allclose(probs, ref_probs, atol=5e-2, rtol=5e-2)

    # 2) Exact f32 path, ragged HW=225 with tile_hw=128 (multi-tile grid +
    #    Pallas boundary block + lane masking), strict tolerance.
    x2 = jax.random.normal(kx, (B, C, 15, 15), dtype=jnp.float32)
    loss2, probs2 = cluster_lookup_forward(x2, clusters, alpha, tile_hw=128,
                                           use_bf16_dot=False)
    jax.block_until_ready((loss2, probs2))
    ref_loss2, ref_probs2 = _reference(x2, clusters, alpha)
    assert probs2.shape == (B, n_classes, 15, 15)
    assert jnp.allclose(loss2, ref_loss2, atol=1e-5, rtol=1e-5)
    assert jnp.allclose(probs2, ref_probs2, atol=1e-5, rtol=1e-5)

    # 3) Fast path on the ragged shape: garbage-lane masking with bf16/approx.
    loss3, probs3 = cluster_lookup_forward(x2, clusters, alpha, tile_hw=128)
    jax.block_until_ready((loss3, probs3))
    assert bool(jnp.all(jnp.isfinite(probs3)))
    assert jnp.allclose(loss3, ref_loss2, atol=5e-2, rtol=5e-2)
    assert jnp.allclose(probs3, ref_probs2, atol=5e-2, rtol=5e-2)

    print("KERNEL_OK")
</pallas_src>

<mosaic_0001>
module attributes {stable_mosaic.version = 11 : i64} {
  func.func @_cluster_lookup_kernel(%arg0: i32, %arg1: i32, %arg2: memref<1x4x256xf32, #tpu.memory_space<vmem>>, %arg3: memref<8x4xbf16, #tpu.memory_space<vmem>>, %arg4: memref<1x8x256xf32, #tpu.memory_space<vmem>>, %arg5: memref<1x1x1x256xf32, #tpu.memory_space<vmem>>) attributes {dimension_semantics = [#tpu.dimension_semantics<parallel>, #tpu.dimension_semantics<parallel>], iteration_bounds = array<i64: 2, 1>, scalar_prefetch = 0 : i64, scratch_operands = 0 : i64, tpu.core_type = #tpu.core_type<tc>, window_params = [{transform_indices = @transform_0, window_bounds = array<i64: 1, 4, 256>}, {pipeline_mode = #tpu.pipeline_mode<synchronous>, transform_indices = @transform_1, window_bounds = array<i64: 8, 4>}, {transform_indices = @transform_2, window_bounds = array<i64: 1, 8, 256>}, {transform_indices = @transform_3, window_bounds = array<i64: 1, 1, 1, 256>}]} {
    %c0 = arith.constant 0 : index
    %c0_0 = arith.constant 0 : index
    %c0_1 = arith.constant 0 : index
    %0 = vector.load %arg2[%c0, %c0_0, %c0_1] : memref<1x4x256xf32, #tpu.memory_space<vmem>>, vector<1x4x256xf32>
    %1 = vector.shape_cast %0 : vector<1x4x256xf32> to vector<4x256xf32>
    %2 = arith.mulf %1, %1 : vector<4x256xf32>
    %cst = arith.constant dense<0.000000e+00> : vector<256xf32>
    %3 = vector.multi_reduction <add>, %2, %cst [0] : vector<4x256xf32> to vector<256xf32>
    %4 = vector.shape_cast %3 : vector<256xf32> to vector<1x256xf32>
    %cst_2 = arith.constant 1.000000e-30 : f32
    %5 = vector.broadcast %cst_2 : f32 to vector<1x256xf32>
    %6 = arith.maximumf %4, %5 : vector<1x256xf32>
    %7 = math.rsqrt %6 : vector<1x256xf32>
    %8 = vector.broadcast %7 : vector<1x256xf32> to vector<4x256xf32>
    %9 = arith.mulf %1, %8 : vector<4x256xf32>
    %c0_3 = arith.constant 0 : index
    %c0_4 = arith.constant 0 : index
    %10 = vector.load %arg3[%c0_3, %c0_4] : memref<8x4xbf16, #tpu.memory_space<vmem>>, vector<8x4xbf16>
    %11 = arith.truncf %9 : vector<4x256xf32> to vector<4x256xbf16>
    %cst_5 = arith.constant dense<0.000000e+00> : vector<8x256xf32>
    %12 = tpu.matmul %10, %11, %cst_5 {dimension_numbers = #tpu.dot_dimension_numbers<[1], [0], [0], [1], [0, 0, 1, 1], [], []>} : vector<8x4xbf16>, vector<4x256xbf16>, vector<8x256xf32> -> vector<8x256xf32>
    %cst_6 = arith.constant 3.000000e+00 : f32
    %13 = vector.broadcast %cst_6 : f32 to vector<8x256xf32>
    %14 = arith.mulf %12, %13 : vector<8x256xf32>
    %cst_7 = arith.constant dense<0xFF800000> : vector<256xf32>
    %15 = vector.multi_reduction <maximumf>, %14, %cst_7 [0] : vector<8x256xf32> to vector<256xf32>
    %16 = vector.shape_cast %15 : vector<256xf32> to vector<1x256xf32>
    %17 = vector.broadcast %16 : vector<1x256xf32> to vector<8x256xf32>
    %18 = arith.subf %14, %17 : vector<8x256xf32>
    %19 = math.exp %18 : vector<8x256xf32>
    %cst_8 = arith.constant dense<0.000000e+00> : vector<256xf32>
    %20 = vector.multi_reduction <add>, %19, %cst_8 [0] : vector<8x256xf32> to vector<256xf32>
    %21 = vector.shape_cast %20 : vector<256xf32> to vector<1x256xf32>
    %22 = tpu.reciprocal %21 {approx = true} : vector<1x256xf32> -> vector<1x256xf32>
    %23 = vector.broadcast %22 : vector<1x256xf32> to vector<8x256xf32>
    %24 = arith.mulf %19, %23 : vector<8x256xf32>
    %25 = vector.shape_cast %24 : vector<8x256xf32> to vector<1x8x256xf32>
    %c0_9 = arith.constant 0 : index
    %c0_10 = arith.constant 0 : index
    %c0_11 = arith.constant 0 : index
    %26 = vector.load %arg4[%c0_9, %c0_10, %c0_11] : memref<1x8x256xf32, #tpu.memory_space<vmem>>, vector<1x8x256xf32>
    tpu.vector_store %arg4[%c0_9, %c0_10, %c0_11], %25 {strides = array<i32>} : memref<1x8x256xf32, #tpu.memory_space<vmem>>, vector<1x8x256xf32>,
    %27 = tpu.iota {dimensions = array<i32: 1>} : vector<1x256xi32>
    %c256_i32 = arith.constant 256 : i32
    %28 = arith.muli %arg1, %c256_i32 : i32
    %29 = vector.broadcast %28 : i32 to vector<1x256xi32>
    %30 = arith.addi %29, %27 : vector<1x256xi32>
    %c256_i32_12 = arith.constant 256 : i32
    %31 = vector.broadcast %c256_i32_12 : i32 to vector<1x256xi32>
    %32 = arith.cmpi slt, %30, %31 : vector<1x256xi32>
    %33 = arith.mulf %24, %12 : vector<8x256xf32>
    %cst_13 = arith.constant dense<0.000000e+00> : vector<256xf32>
    %34 = vector.multi_reduction <add>, %33, %cst_13 [0] : vector<8x256xf32> to vector<256xf32>
    %35 = vector.shape_cast %34 : vector<256xf32> to vector<1x256xf32>
    %cst_14 = arith.constant 0.000000e+00 : f32
    %36 = vector.broadcast %cst_14 : f32 to vector<1x256xf32>
    %37 = arith.select %32, %35, %36 : vector<1x256xi1>, vector<1x256xf32>
    %38 = vector.shape_cast %37 : vector<1x256xf32> to vector<1x1x1x256xf32>
    %c0_15 = arith.constant 0 : index
    %c0_16 = arith.constant 0 : index
    %c0_17 = arith.constant 0 : index
    %c0_18 = arith.constant 0 : index
    %39 = vector.load %arg5[%c0_15, %c0_16, %c0_17, %c0_18] : memref<1x1x1x256xf32, #tpu.memory_space<vmem>>, vector<1x1x1x256xf32>
    tpu.vector_store %arg5[%c0_15, %c0_16, %c0_17, %c0_18], %38 {strides = array<i32>} : memref<1x1x1x256xf32, #tpu.memory_space<vmem>>, vector<1x1x1x256xf32>,
    return
  }
  func.func @transform_0(%arg0: i32, %arg1: i32) -> (i32, i32, i32) {
    %c0_i32 = arith.constant 0 : i32
    %c0_i32_0 = arith.constant 0 : i32
    return %arg0, %c0_i32, %arg1 : i32, i32, i32
  }
  func.func @transform_1(%arg0: i32, %arg1: i32) -> (i32, i32) {
    %c0_i32 = arith.constant 0 : i32
    %c0_i32_0 = arith.constant 0 : i32
    %c0_i32_1 = arith.constant 0 : i32
    return %c0_i32, %c0_i32_0 : i32, i32
  }
  func.func @transform_2(%arg0: i32, %arg1: i32) -> (i32, i32, i32) {
    %c0_i32 = arith.constant 0 : i32
    %c0_i32_0 = arith.constant 0 : i32
    return %arg0, %c0_i32, %arg1 : i32, i32, i32
  }
  func.func @transform_3(%arg0: i32, %arg1: i32) -> (i32, i32, i32, i32) {
    %c0_i32 = arith.constant 0 : i32
    %c0_i32_0 = arith.constant 0 : i32
    %c0_i32_1 = arith.constant 0 : i32
    return %arg0, %arg1, %c0_i32, %c0_i32_0 : i32, i32, i32, i32
  }
}

</mosaic_0001>

<llo_original>
// kernel: tpu_custom_call.1
$region0: #{tpu_custom_call.1}
  #allocation0 [shape = 'u32[]', space=smem, size = 0x4, offset = 0x4, fixed_abs, tag = 'smem constant byte address 0x4 - core index']
  #allocation1 [shape = 'u32[72,128]{1,0:T(1,128)}', space=vmem, size = 0x9000, scoped, tag = 'internal scratch']
  %s0 = inlined_call_operand.hbm [shape: f32[2,4,256], index: 0, kind: input, shape index: {}]
  %s1 = inlined_call_operand.vmem [shape: bf16[8,4], index: 1, kind: input, shape index: {}]
  %s2 = inlined_call_operand.hbm [shape: f32[2,8,256], index: 2, kind: output, shape index: {0}]
  %s3 = inlined_call_operand.hbm [shape: f32[2,1,1,256], index: 3, kind: output, shape index: {1}]
  %4 = xla_tuple %s2, %s3
  %s5 = sld [smem:[#allocation0]]
  $region53: #{tpu_custom_call.1} parent=0
    _
  %s7 = ssub.s32 1, %s5
  %s8 = scalar_select 0, %s7, %s5
  $region1: #{tpu_custom_call.1} parent=0
    #allocation2 [shape = 'u8[8192]{0}', space=vmem, size = 0x2000, scoped, tag = 'input window, operand 0']
    #allocation3 [shape = 's32[2]{0}', space=sflag, size = 0x8, scoped, tag = 'scoped memory for tpu_custom_call.1']
    #allocation4 [shape = 's32[2]{0}', space=sflag, size = 0x8, scoped, tag = 'scoped memory for tpu_custom_call.1']
    #allocation5 [shape = 'u8[16384]{0}', space=vmem, size = 0x4000, scoped, tag = 'output window, operand 0']
    #allocation6 [shape = 'u8[2048]{0}', space=vmem, size = 0x800, scoped, tag = 'output window, operand 1']
    #allocation7 [shape = 's32[2]{0}', space=sflag, size = 0x8, scoped, tag = 'scoped memory for tpu_custom_call.1']
    %9 = vsyncpa [#allocation3], 0
    %s10 = scalar_lea.sflag [#allocation3], 1
    %11 = vsyncpa %s10, 0
    %12 = vsyncpa [#allocation4], 0
    %s13 = scalar_lea.sflag [#allocation4], 1
    %14 = vsyncpa %s13, 0
    %15 = vsyncpa [#allocation7], 0
    %s16 = scalar_lea.sflag [#allocation7], 1
    %17 = vsyncpa %s16, 0
    loop: start=0, step=1, limit=4
    $region2: #{tpu_custom_call.1} parent=1 // loop_pre_header
      _
    $region3: #{tpu_custom_call.1} parent=1 // loop_header
      %s19 = sphi 0, %s23
      %p20 = scmp.ge.s32.totalorder %s19, 4
      %s26 = sphi 0, %s38
      %s27 = sphi 0, %s34
      %s28 = sphi 0, %s26
      %s29 = sphi 0, %s27
      %s30 = sphi 0, %s28
      %s31 = sphi 0, %s29
      %s43 = sphi 0, %s45
      %s46 = sphi 0, %s43
      %s47 = sphi 0, %s46
      %s63 = sphi 0, %s47
      %s67 = sphi 0, %s67
      %s69 = sphi 0, %s67
      %s70 = sphi 0, %s69
      %s84 = sphi 0, %s70
      %s92 = sphi 0, %s94
      %s95 = sphi 0, %s92
      %s96 = sphi 0, %s95
      %s112 = sphi 0, %s96
      %s120 = sphi 0, %s122
      %s123 = sphi 0, %s120
      %s124 = sphi 0, %s123
      %s140 = sphi 0, %s124
    $region4: #{tpu_custom_call.1} parent=1 // loop_header_branch
      %22 = sbr.rel (%p20) target = $region8
    $region5: #{tpu_custom_call.1} parent=1 // loop_body
      %s24 = ssub.s32 %s19, 1
      %s25 = ssub.s32 %s19, 2
      %s32 = sadd.s32 1, %s27
      %p33 = scmp.ge.s32.totalorder %s32, 1
      %s34 = scalar_select %p33, 0, %s32
      %s35 = sadd.s32 1, %s26
      %s36 = scalar_select %p33, %s35, %s26
      %p37 = scmp.ge.s32.totalorder %s36, 2
      %s38 = scalar_select %p37, 0, %s36
      %s39 = ssub.s32 %s26, %s38
      %s40 = ssub.s32 %s27, %s34
      %s41 = sor.u32 %s39, %s40
      %p42 = scmp.eq.s32.totalorder %s41, 0
      %s44 = sadd.s32 %s43, 1
      %s45 = scalar_select %p42, %s43, %s44
      %p48 = pneg %p42
      %p49 = scmp.eq.s32.totalorder %s19, 1
      %p50 = por %p48, %p49
      %p51 = scmp.ne.s32.totalorder %s43, %s46
      %p52 = scmp.eq.s32.totalorder %s19, 0
      %p53 = por %p51, %p52
      %p54 = scmp.ne.s32.totalorder %s43, %s46
      %p55 = scmp.eq.s32.totalorder %s24, 1
      %p56 = por %p54, %p55
      %p57 = scmp.ne.s32.totalorder %s46, %s47
      %p58 = scmp.eq.s32.totalorder %s24, 0
      %p59 = por %p57, %p58
      %p60 = scmp.ne.s32.totalorder %s46, %s47
      %p61 = scmp.eq.s32.totalorder %s25, 1
      %p62 = por %p60, %p61
      %p64 = scmp.ne.s32.totalorder %s47, %s63
      %p65 = scmp.eq.s32.totalorder %s25, 0
      %p66 = por %p64, %p65
      %s68 = sadd.s32 %s67, 1
      %p71 = scmp.eq.s32.totalorder %s19, 1
      %p72 = scmp.ne.s32.totalorder %s67, %s69
      %p73 = scmp.eq.s32.totalorder %s19, 0
      %p74 = por %p72, %p73
      %p75 = scmp.ne.s32.totalorder %s67, %s69
      %p76 = scmp.eq.s32.totalorder %s24, 1
      %p77 = por %p75, %p76
      %p78 = scmp.ne.s32.totalorder %s69, %s70
      %p79 = scmp.eq.s32.totalorder %s24, 0
      %p80 = por %p78, %p79
      %p81 = scmp.ne.s32.totalorder %s69, %s70
      %p82 = scmp.eq.s32.totalorder %s25, 1
      %p83 = por %p81, %p82
      %p85 = scmp.ne.s32.totalorder %s70, %s84
      %p86 = scmp.eq.s32.totalorder %s25, 0
      %p87 = por %p85, %p86
      %s88 = ssub.s32 %s26, %s38
      %s89 = ssub.s32 %s27, %s34
      %s90 = sor.u32 %s88, %s89
      %p91 = scmp.eq.s32.totalorder %s90, 0
      %s93 = sadd.s32 %s92, 1
      %s94 = scalar_select %p91, %s92, %s93
      %p97 = pneg %p91
      %p98 = scmp.eq.s32.totalorder %s19, 1
      %p99 = por %p97, %p98
      %p100 = scmp.ne.s32.totalorder %s92, %s95
      %p101 = scmp.eq.s32.totalorder %s19, 0
      %p102 = por %p100, %p101
      %p103 = scmp.ne.s32.totalorder %s92, %s95
      %p104 = scmp.eq.s32.totalorder %s24, 1
      %p105 = por %p103, %p104
      %p106 = scmp.ne.s32.totalorder %s95, %s96
      %p107 = scmp.eq.s32.totalorder %s24, 0
      %p108 = por %p106, %p107
      %p109 = scmp.ne.s32.totalorder %s95, %s96
      %p110 = scmp.eq.s32.totalorder %s25, 1
      %p111 = por %p109, %p110
      %p113 = scmp.ne.s32.totalorder %s96, %s112
      %p114 = scmp.eq.s32.totalorder %s25, 0
      %p115 = por %p113, %p114
      %s116 = ssub.s32 %s26, %s38
      %s117 = ssub.s32 %s27, %s34
      %s118 = sor.u32 %s116, %s117
      %p119 = scmp.eq.s32.totalorder %s118, 0
      %s121 = sadd.s32 %s120, 1
      %s122 = scalar_select %p119, %s120, %s121
      %p125 = pneg %p119
      %p126 = scmp.eq.s32.totalorder %s19, 1
      %p127 = por %p125, %p126
      %p128 = scmp.ne.s32.totalorder %s120, %s123
      %p129 = scmp.eq.s32.totalorder %s19, 0
      %p130 = por %p128, %p129
      %p131 = scmp.ne.s32.totalorder %s120, %s123
      %p132 = scmp.eq.s32.totalorder %s24, 1
      %p133 = por %p131, %p132
      %p134 = scmp.ne.s32.totalorder %s123, %s124
      %p135 = scmp.eq.s32.totalorder %s24, 0
      %p136 = por %p134, %p135
      %p137 = scmp.ne.s32.totalorder %s123, %s124
      %p138 = scmp.eq.s32.totalorder %s25, 1
      %p139 = por %p137, %p138
      %p141 = scmp.ne.s32.totalorder %s124, %s140
      %p142 = scmp.eq.s32.totalorder %s25, 0
      %p143 = por %p141, %p142
      %p144 = scmp.le.s32.totalorder 1, %s19
      %p145 = scmp.lt.s32.totalorder %s19, 3
      %p146 = pnand %p144, %p145
      %p147 = pneg %p146
      // Predicated region
      $region9: #{tpu_custom_call.1} parent=5 // pred_check
        _
      $region10: #{tpu_custom_call.1} parent=5 // pred_check_branch
        %149 = sbr.rel (%p146) target = $region12
      $region11: #{tpu_custom_call.1} parent=5 // pred_region
        %s150 = ssub.s32 %s19, 1
        // Predicated region
        $region13: #{tpu_custom_call.1} parent=11 // pred_check
          %p151 = pneg %p80
        $region14: #{tpu_custom_call.1} parent=11 // pred_check_branch
          %153 = sbr.rel (%p151) target = $region16
        $region15: #{tpu_custom_call.1} parent=11 // pred_region
          _
        $region16: #{tpu_custom_call.1} parent=11 // pred_fallthru
          _
      $region12: #{tpu_custom_call.1} parent=5 // pred_fallthru
        _
      %p154 = scmp.lt.s32.totalorder %s19, 2
      // Predicated region
      $region17: #{tpu_custom_call.1} parent=5 // pred_check
        %p155 = pneg %p154
      $region18: #{tpu_custom_call.1} parent=5 // pred_check_branch
        %157 = sbr.rel (%p155) target = $region20
      $region19: #{tpu_custom_call.1} parent=5 // pred_region
        // Predicated region
        $region21: #{tpu_custom_call.1} parent=19 // pred_check
          %p158 = pneg %p53
        $region22: #{tpu_custom_call.1} parent=19 // pred_check_branch
          %160 = sbr.rel (%p158) target = $region24
        $region23: #{tpu_custom_call.1} parent=19 // pred_region
          %s161 = sand.u32 %s43, 1
          %s162 = scalar_lea.sflag [#allocation3], %s161
          %s163 = sand.u32 %s43, 1
          %s164 = smul.addr %s163, 8
          %s165 = scalar_lea.vmem [#allocation2], %s164
          %s166 = smul.u32 2, %s27
          %168 = vsyncadd %s162, 0
          %s169 = smul.addr %s26, 2
          %s170 = sadd.s32 %s166, %s169
          %s171 = smul.addr %s170, 4
          %s172 = scalar_lea.hbm %s0, %s171
          %s174 = sshll.u32 %s172, 4
          %s175 = int_to_ptr.hbm [resolvable:$true] %s174
          %s176 = sshll.u32 %s165, 4
          %s177 = int_to_ptr.vmem [resolvable:$true] %s176
          %179 = dma.hbm_to_vmem [thread:$0]  %s175, 128, %s177, %s162
        $region24: #{tpu_custom_call.1} parent=19 // pred_fallthru
          _
      $region20: #{tpu_custom_call.1} parent=5 // pred_fallthru
        _
      %p180 = scmp.le.s32.totalorder 1, %s19
      %p181 = scmp.lt.s32.totalorder %s19, 3
      %p182 = pnand %p180, %p181
      %p183 = pneg %p182
      // Predicated region
      $region25: #{tpu_custom_call.1} parent=5 // pred_check
        _
      $region26: #{tpu_custom_call.1} parent=5 // pred_check_branch
        %185 = sbr.rel (%p182) target = $region28
      $region27: #{tpu_custom_call.1} parent=5 // pred_region
        %s186 = ssub.s32 %s19, 1
        %s187 = sand.u32 %s46, 1
        %s188 = scalar_lea.sflag [#allocation3], %s187
        %s189 = sand.u32 %s46, 1
        %s190 = smul.addr %s189, 8
        %s191 = scalar_lea.vmem [#allocation2], %s190
        // Predicated region
        $region29: #{tpu_custom_call.1} parent=27 // pred_check
          %p192 = pneg %p59
        $region30: #{tpu_custom_call.1} parent=27 // pred_check_branch
          %194 = sbr.rel (%p192) target = $region32
        $region31: #{tpu_custom_call.1} parent=27 // pred_region
          %196 = dma.done %s188, 128
        $region32: #{tpu_custom_call.1} parent=27 // pred_fallthru
          _
        %s197 = sand.u32 %s46, 1
        %s198 = scalar_lea.sflag [#allocation3], %s197
        %s199 = sand.u32 %s46, 1
        %s200 = smul.addr %s199, 8
        %s201 = scalar_lea.vmem [#allocation2], %s200
        %p202 = pneg %p59
        %p203 = pneg %p56
        %p204 = pneg %p80
        %p205 = pneg %p77
        %p206 = pneg %p108
        %p207 = pneg %p105
        %s208 = sand.u32 %s95, 1
        %s209 = scalar_lea.sflag [#allocation4], %s208
        %s210 = sand.u32 %s95, 1
        %s211 = smul.addr %s210, 16
        %s212 = scalar_lea.vmem [#allocation5], %s211
        %p213 = pneg %p136
        %p214 = pneg %p133
        %s215 = sand.u32 %s123, 1
        %s216 = scalar_lea.sflag [#allocation7], %s215
        %s217 = sand.u32 %s123, 1
        %s218 = smul.addr %s217, 2
        %s219 = scalar_lea.vmem [#allocation6], %s218
        %s220 = smul.u32 2, %s29
        %s221 = smul.u32 2, %s29
        %v223 = vld [vmem:[%s191] sm:$0xff]
        %v224 = vmul.f32 %v223, %v223
        %226 = vst [vmem:[#allocation1] ss:$2 sm:$0xff] %v224
        %v227 = vld.sshfl [vmem:[#allocation1] sm:$0xff pattern:$0x75316420]
        %v228 = vld.sshfl [vmem:[#allocation1 + $0x8] sm:$0xff pattern:$0x75316420]
        %vm231 = vcmask 1043456
        %v232 = vsel %vm231, %v227, 0.0
        %v233 = vrot.slane %v232, 4
        %v234 = vadd.f32 %v232, %v233
        %v235 = vrot.slane %v234, 2
        %v236 = vadd.f32 %v234, %v235
        %v237 = vrot.slane %v236, 1
        %v238 = vadd.f32 %v236, %v237
        %v239 = vsel %vm231, %v228, 0.0
        %v240 = vrot.slane %v239, 4
        %v241 = vadd.f32 %v239, %v240
        %v242 = vrot.slane %v241, 2
        %v243 = vadd.f32 %v241, %v242
        %v244 = vrot.slane %v243, 1
        %v245 = vadd.f32 %v243, %v244
        %v246 = vmax.f32 %v238, 1e-30
        %v247 = vmax.f32 %v245, 1e-30
        %v248 = vrsqrt.pop %v246
        %v249 = vmul.f32 %v248, %v246
        %v250 = vmul.f32 %v249, %v248
        %v251 = vmul.f32 0.5, %v250
        %v252 = vsub.f32 1.5, %v251
        %v253 = vmul.f32 %v248, %v252
        %vm254 = vweird.f32 %v246
        %vm255 = vweird.f32 %v248
        %vm256 = vmor %vm254, %vm255
        %v257 = vsel %vm256, %v248, %v253
        %v258 = vrsqrt.pop %v247
        %v259 = vmul.f32 %v258, %v247
        %v260 = vmul.f32 %v259, %v258
        %v261 = vmul.f32 0.5, %v260
        %v262 = vsub.f32 1.5, %v261
        %v263 = vmul.f32 %v258, %v262
        %vm264 = vweird.f32 %v247
        %vm265 = vweird.f32 %v258
        %vm266 = vmor %vm264, %vm265
        %v267 = vsel %vm266, %v258, %v263
        %v270 = vrot.slane %v267, 4
        %v271 = vsel %vm231, %v257, %v270
        %v273 = vmul.f32 %v223, %v271
        %v274 = vld [vmem:[%s1] sm:$0xf]
        %276 = vst [vmem:[#allocation1] ss:$2 sm:$0xff] %v273
        %v277 = vld.sshfl [vmem:[#allocation1] sm:$0xff pattern:$0x75316420]
        %v278 = vld.sshfl [vmem:[#allocation1 + $0x8] sm:$0xff pattern:$0x75316420]
        %v281 = vpack.c.bf16 %v277, %v277
        %v282 = vpack.c.bf16 %v278, %v278
        %vm283 = vcmask 31744
        %v285 = vsel %vm283, %v274, 0
        %vm287 = vcmask 1041408
        %v289 = vsel %vm287, %v281, 0
        %v292 = vsel %vm287, %v282, 0
        %294 = vmatpush.bf16.msra.mxu0 0
        %295 = vmatpush.bf16.msra.mxu0 0
        %296 = vmatpush.bf16.msra.mxu0 0
        %297 = vmatpush.bf16.msra.mxu0 0
        %298 = vmatpush.bf16.msra.mxu0 0
        %299 = vmatpush.bf16.msra.mxu0 0
        %300 = vmatpush.bf16.msra.mxu0 0
        %301 = vmatpush.bf16.msra.mxu0 %v289
        %302 = vmatmul.bf16.gmra.mxu0 %v285
        %v303 = vpop.f32.mrf.mxu0
        %v304 = vadd.f32 0.0, %v303
        %v305 = vpop.f32.mrf.mxu0
        %306 = vdwg.mxu0
        %307 = vmatpush.bf16.msra.mxu0 0
        %308 = vmatpush.bf16.msra.mxu0 0
        %309 = vmatpush.bf16.msra.mxu0 0
        %310 = vmatpush.bf16.msra.mxu0 0
        %311 = vmatpush.bf16.msra.mxu0 0
        %312 = vmatpush.bf16.msra.mxu0 0
        %313 = vmatpush.bf16.msra.mxu0 0
        %314 = vmatpush.bf16.msra.mxu0 %v292
        %315 = vmatmul.bf16.gmra.mxu0 %v285
        %v316 = vpop.f32.mrf.mxu0
        %v317 = vadd.f32 0.0, %v316
        %v318 = vpop.f32.mrf.mxu0
        %319 = vdwg.mxu0
        %v320 = vmul.f32 %v304, 3.0
        %v321 = vmul.f32 %v317, 3.0
        %v322 = vrot.slane %v320, 4
        %v323 = vmax.f32 %v320, %v322
        %v324 = vrot.slane %v323, 2
        %v325 = vmax.f32 %v323, %v324
        %v326 = vrot.slane %v325, 1
        %v327 = vmax.f32 %v325, %v326
        %v328 = vrot.slane %v321, 4
        %v329 = vmax.f32 %v321, %v328
        %v330 = vrot.slane %v329, 2
        %v331 = vmax.f32 %v329, %v330
        %v332 = vrot.slane %v331, 1
        %v333 = vmax.f32 %v331, %v332
        %v334 = vsub.f32 %v320, %v327
        %v335 = vsub.f32 %v321, %v333
        %v336 = vmul.f32 %v334, 1.442695
        %v337 = vpow.pop %v336
        %v338 = vmul.f32 %v335, 1.442695
        %v339 = vpow.pop %v338
        %v340 = vrot.slane %v337, 4
        %v341 = vadd.f32 %v337, %v340
        %v342 = vrot.slane %v341, 2
        %v343 = vadd.f32 %v341, %v342
        %v344 = vrot.slane %v343, 1
        %v345 = vadd.f32 %v343, %v344
        %v346 = vrot.slane %v339, 4
        %v347 = vadd.f32 %v339, %v346
        %v348 = vrot.slane %v347, 2
        %v349 = vadd.f32 %v347, %v348
        %v350 = vrot.slane %v349, 1
        %v351 = vadd.f32 %v349, %v350
        %v352 = vrcp.pop %v345
        %v353 = vrcp.pop %v351
        %v354 = vmul.f32 %v337, %v352
        %v355 = vmul.f32 %v339, %v353
        %356 = vst [vmem:[%s212] sm:$0xff] %v354
        %357 = vst [vmem:[%s212 + $0x8] sm:$0xff] %v355
        %v358 = vlaneseq
        %v359 = vand.u32 %v358, 127
        %v360 = vadd.s32 %v359, 128
        %s361 = smul.u32 %s29, 256
        %v362 = vstv %s361
        %v363 = vadd.s32 %v362, %v359
        %v364 = vadd.s32 %v362, %v360
        %vm365 = vcmp.lt.s32.totalorder %v363, 256
        %vm366 = vcmp.lt.s32.totalorder %v364, 256
        %v367 = vmul.f32 %v354, %v304
        %v368 = vmul.f32 %v355, %v317
        %v369 = vrot.slane %v367, 4
        %v370 = vadd.f32 %v367, %v369
        %v371 = vrot.slane %v370, 2
        %v372 = vadd.f32 %v370, %v371
        %v373 = vrot.slane %v372, 1
        %v374 = vadd.f32 %v372, %v373
        %v375 = vrot.slane %v368, 4
        %v376 = vadd.f32 %v368, %v375
        %v377 = vrot.slane %v376, 2
        %v378 = vadd.f32 %v376, %v377
        %v379 = vrot.slane %v378, 1
        %v380 = vadd.f32 %v378, %v379
        %v381 = vsel %vm365, %v374, 0.0
        %v382 = vsel %vm366, %v380, 0.0
        %v385 = vrot.slane %v382, 7
        %vm386 = vcmask 1040384
        %v387 = vsel %vm386, %v381, %v385
        %v389 = vlaneseq
        %vm390 = vcmp.ge.s32.totalorder %v389, 0
        %vm391 = vcmp.lt.s32.totalorder %v389, 256
        %vm392 = vmand %vm390, %vm391
        %393 = vst.msk [vmem:[%s219] sm:$0x3] %vm392, %v387
        %s394 = sand.u32 %s95, 1
        %s395 = scalar_lea.sflag [#allocation4], %s394
        %s396 = sand.u32 %s95, 1
        %s397 = smul.addr %s396, 16
        %s398 = scalar_lea.vmem [#allocation5], %s397
        %s399 = sand.u32 %s123, 1
        %s400 = scalar_lea.sflag [#allocation7], %s399
        %s401 = sand.u32 %s123, 1
        %s402 = smul.addr %s401, 2
        %s403 = scalar_lea.vmem [#allocation6], %s402
        // Predicated region
        $region33: #{tpu_custom_call.1} parent=27 // pred_check
          %p404 = pneg %p105
        $region34: #{tpu_custom_call.1} parent=27 // pred_check_branch
          %406 = sbr.rel (%p404) target = $region36
        $region35: #{tpu_custom_call.1} parent=27 // pred_region
          %s407 = smul.u32 2, %s29
          %409 = vsyncadd %s395, 0
          %s410 = smul.addr %s28, 2
          %s411 = sadd.s32 %s407, %s410
          %s412 = smul.addr %s411, 8
          %s413 = scalar_lea.hbm %s2, %s412
          %s415 = sshll.u32 %s398, 4
          %s416 = int_to_ptr.vmem [resolvable:$true] %s415
          %s417 = sshll.u32 %s413, 4
          %s418 = int_to_ptr.hbm [resolvable:$true] %s417
          %420 = dma.vmem_to_hbm [thread:$0]  %s416, 256, %s418, %s395
        $region36: #{tpu_custom_call.1} parent=27 // pred_fallthru
          _
        // Predicated region
        $region37: #{tpu_custom_call.1} parent=27 // pred_check
          %p421 = pneg %p133
        $region38: #{tpu_custom_call.1} parent=27 // pred_check_branch
          %423 = sbr.rel (%p421) target = $region40
        $region39: #{tpu_custom_call.1} parent=27 // pred_region
          %425 = vsyncadd %s400, 0
          %s426 = smul.addr %s29, 2
          %s427 = smul.addr %s28, 2
          %s428 = sadd.s32 %s426, %s427
          %s429 = scalar_lea.hbm %s3, %s428
          %s431 = sshll.u32 %s403, 4
          %s432 = int_to_ptr.vmem [resolvable:$true] %s431
          %s433 = sshll.u32 %s429, 4
          %s434 = int_to_ptr.hbm [resolvable:$true] %s433
          %436 = dma.vmem_to_hbm [thread:$0]  %s432, 32, %s434, %s400
        $region40: #{tpu_custom_call.1} parent=27 // pred_fallthru
          _
      $region28: #{tpu_custom_call.1} parent=5 // pred_fallthru
        _
      %p437 = scmp.le.s32.totalorder 2, %s19
      // Predicated region
      $region41: #{tpu_custom_call.1} parent=5 // pred_check
        %p438 = pneg %p437
      $region42: #{tpu_custom_call.1} parent=5 // pred_check_branch
        %440 = sbr.rel (%p438) target = $region44
      $region43: #{tpu_custom_call.1} parent=5 // pred_region
        %s441 = ssub.s32 %s19, 2
        // Predicated region
        $region45: #{tpu_custom_call.1} parent=43 // pred_check
          %p442 = pneg %p111
        $region46: #{tpu_custom_call.1} parent=43 // pred_check_branch
          %444 = sbr.rel (%p442) target = $region48
        $region47: #{tpu_custom_call.1} parent=43 // pred_region
          %s445 = sand.u32 %s96, 1
          %s446 = scalar_lea.sflag [#allocation4], %s445
          %s447 = sand.u32 %s96, 1
          %s448 = smul.addr %s447, 16
          %s449 = scalar_lea.vmem [#allocation5], %s448
          %451 = dma.done %s446, 256
        $region48: #{tpu_custom_call.1} parent=43 // pred_fallthru
          _
        // Predicated region
        $region49: #{tpu_custom_call.1} parent=43 // pred_check
          %p452 = pneg %p139
        $region50: #{tpu_custom_call.1} parent=43 // pred_check_branch
          %454 = sbr.rel (%p452) target = $region52
        $region51: #{tpu_custom_call.1} parent=43 // pred_region
          %s455 = sand.u32 %s124, 1
          %s456 = scalar_lea.sflag [#allocation7], %s455
          %s457 = sand.u32 %s124, 1
          %s458 = smul.addr %s457, 2
          %s459 = scalar_lea.vmem [#allocation6], %s458
          %461 = dma.done %s456, 32
        $region52: #{tpu_custom_call.1} parent=43 // pred_fallthru
          _
      $region44: #{tpu_custom_call.1} parent=5 // pred_fallthru
        _
    $region6: #{tpu_custom_call.1} parent=1 // loop_footer
      %s23 = sadd.s32 1, %s19
    $region7: #{tpu_custom_call.1} parent=1 // loop_footer_branch
      %18 = sbr.rel target = $region3
    $region8: #{tpu_custom_call.1} parent=1 // loop_exit
      _
    %462 = vsyncpa [#allocation3], 1
    %s463 = scalar_lea.sflag [#allocation3], 1
    %464 = vsyncpa %s463, 1
    %465 = vsyncpa [#allocation4], 1
    %s466 = scalar_lea.sflag [#allocation4], 1
    %467 = vsyncpa %s466, 1
    %468 = vsyncpa [#allocation7], 1
    %s469 = scalar_lea.sflag [#allocation7], 1
    %470 = vsyncpa %s469, 1

</llo_original>
